<compile_context>
chip_gen: v6e
topology: v6e:2x2x1
jax: 0.10.0
libtpu: 0.0.40
codegen_flags: <defaults>
</compile_context>

<pallas_src>
import jax
import jax.numpy as jnp
import numpy as np
from jax.experimental import pallas as pl
from jax.experimental.pallas import tpu as pltpu


LANES = 128
MAX_ROWS_PER_STEP = 512     # 512 rows * 128 lanes ~= 1.5 MB HBM traffic / step


def _round_up(n, m):
    return ((n + m - 1) // m) * m


def model_kernel(p_ref, x_ref, code_ref, o_ref):
    # p_ref (SMEM, f32[14]):
    #   [w0..w3, s0_0+b, s0_1+b, s1_0..s1_3, s2_0..s2_3]
    # x_ref    : (4, TBr, 128) f32   continuous features, batch on (sublane,lane)
    # code_ref : (TBr, 128) int32    packed categorical indices c0|c1<<2|c2<<4
    # o_ref    : (TBr, 128) f32      dense output tile
    x0 = x_ref[0]
    x1 = x_ref[1]
    x2 = x_ref[2]
    x3 = x_ref[3]
    code = code_ref[...]

    # Continuous part: x @ W[0:4] as scalar-weighted adds (VPU only, no MXU).
    acc = p_ref[0] * x0 + p_ref[1] * x1 + p_ref[2] * x2 + p_ref[3] * x3

    # Unpack the three categorical indices from one int32 per element.
    c0 = code & 3
    c1 = (code >> 2) & 3
    c2 = (code >> 4) & 3

    # Embedding 0 (num_embeddings=2): 2-way select; bias is folded in here.
    acc = acc + jnp.where(c0 == 0, p_ref[4], p_ref[5])

    # Embeddings 1 & 2 (num_embeddings=4): flat, independent masked adds (ILP).
    acc = acc + (jnp.where(c1 == 0, p_ref[6], 0.0)
                 + jnp.where(c1 == 1, p_ref[7], 0.0)
                 + jnp.where(c1 == 2, p_ref[8], 0.0)
                 + jnp.where(c1 == 3, p_ref[9], 0.0))
    acc = acc + (jnp.where(c2 == 0, p_ref[10], 0.0)
                 + jnp.where(c2 == 1, p_ref[11], 0.0)
                 + jnp.where(c2 == 2, p_ref[12], 0.0)
                 + jnp.where(c2 == 3, p_ref[13], 0.0))

    o_ref[...] = acc


@jax.jit
def model_forward(x, x_classes, params):
    B = x.shape[0]

    # --- batch tiling: 2D (rows x 128-lane) layout ------------------------
    R0 = _round_up(B, LANES) // LANES              # rows needed for the batch
    if R0 <= 8:
        TBr = R0                                   # tiny batch: one small tile
    else:
        # >= 2 grid steps (both v7x TensorCores busy), rows per step <= 512.
        TBr = min(MAX_ROWS_PER_STEP, _round_up((R0 + 1) // 2, 8))
    R = _round_up(R0, TBr)
    B_pad = R * LANES
    grid = (R // TBr,)

    # --- fold embedding tables + bias into 14 scalars (exact, f32) --------
    W = params["W"].astype(jnp.float32)                          # (10, 1)
    b = params["b"].reshape(-1)[0].astype(jnp.float32)
    s0 = (params["E0"].astype(jnp.float32) @ W[4:6, :])[:, 0] + b   # (2,)
    s1 = (params["E1"].astype(jnp.float32) @ W[6:8, :])[:, 0]       # (4,)
    s2 = (params["E2"].astype(jnp.float32) @ W[8:10, :])[:, 0]      # (4,)
    p = jnp.concatenate([W[0:4, 0], s0, s1, s2]).astype(jnp.float32)  # (14,)

    # --- lane/sublane-dense inputs (fused into one pass under jit) --------
    # x: (B,4) -> (4, R, 128)
    x_t = jnp.pad(x.T.astype(jnp.float32), ((0, 0), (0, B_pad - B)))
    x_t = x_t.reshape(4, R, LANES)
    # xc: (B,3) -> packed int32 (R, 128); padded lanes get code 0 (in range).
    xc = x_classes.astype(jnp.int32)
    code = xc[:, 0] + (xc[:, 1] << 2) + (xc[:, 2] << 4)
    code = jnp.pad(code, (0, B_pad - B)).reshape(R, LANES)

    out = pl.pallas_call(
        model_kernel,
        out_shape=jax.ShapeDtypeStruct((R, LANES), jnp.float32),
        grid=grid,
        in_specs=[
            pl.BlockSpec(memory_space=pltpu.MemorySpace.SMEM),     # folded params
            pl.BlockSpec((4, TBr, LANES), lambda i: (0, i, 0)),    # x
            pl.BlockSpec((TBr, LANES), lambda i: (i, 0)),          # packed indices
        ],
        out_specs=pl.BlockSpec((TBr, LANES), lambda i: (i, 0)),
        compiler_params=pltpu.CompilerParams(
            dimension_semantics=("parallel",)),
    )(p, x_t, code)

    # (R,128) -> flat batch -> (B, 1); padded lanes are dropped here.
    return out.reshape(-1)[:B].reshape(B, 1)


if __name__ == "__main__":
    B = 8
    key = jax.random.PRNGKey(0)
    k = jax.random.split(key, 8)

    # Deterministic parameter init (shapes from the module's __init__).
    E0 = jax.random.normal(k[0], (2, 2), jnp.float32)   # Embedding(2, 2)
    E1 = jax.random.normal(k[1], (4, 2), jnp.float32)   # Embedding(4, 2)
    E2 = jax.random.normal(k[2], (4, 2), jnp.float32)   # Embedding(4, 2)
    bound = 1.0 / np.sqrt(10.0)
    W = jax.random.uniform(k[3], (10, 1), jnp.float32, -bound, bound)  # Linear weight (transposed)
    b = jax.random.uniform(k[4], (1, 1), jnp.float32, -bound, bound)   # Linear bias

    # Example inputs: 4 standardized continuous feats + 3 categorical indices.
    x = jax.random.normal(k[5], (B, 4), jnp.float32)
    xc = jnp.stack([
        jax.random.randint(jax.random.fold_in(k[6], 0), (B,), 0, 2),
        jax.random.randint(jax.random.fold_in(k[6], 1), (B,), 0, 4),
        jax.random.randint(jax.random.fold_in(k[6], 2), (B,), 0, 4),
    ], axis=1).astype(jnp.int32)

    params = dict(E0=E0, E1=E1, E2=E2, W=W, b=b)

    out = model_forward(x, xc, params)
    out = jax.block_until_ready(out)

    # Pure-JAX reference for correctness.
    feats = jnp.concatenate(
        [x, E0[xc[:, 0]], E1[xc[:, 1]], E2[xc[:, 2]]], axis=-1)  # (B, 10)
    ref = feats @ W + b
    assert out.shape == (B, 1)
    np.testing.assert_allclose(np.asarray(out), np.asarray(ref),
                               rtol=1e-5, atol=1e-5)
    print("KERNEL_OK")
</pallas_src>

<mosaic_0001>
module attributes {stable_mosaic.version = 11 : i64} {
  func.func @model_kernel(%arg0: i32, %arg1: memref<14xf32, #tpu.memory_space<smem>>, %arg2: memref<4x1x128xf32, #tpu.memory_space<vmem>>, %arg3: memref<1x128xi32, #tpu.memory_space<vmem>>, %arg4: memref<1x128xf32, #tpu.memory_space<vmem>>) attributes {dimension_semantics = [#tpu.dimension_semantics<parallel>], iteration_bounds = array<i64: 1>, scalar_prefetch = 0 : i64, scratch_operands = 0 : i64, tpu.core_type = #tpu.core_type<tc>, window_params = [{transform_indices = @transform_0, window_bounds = array<i64: 14>}, {transform_indices = @transform_1, window_bounds = array<i64: 4, 1, 128>}, {transform_indices = @transform_2, window_bounds = array<i64: 1, 128>}, {transform_indices = @transform_3, window_bounds = array<i64: 1, 128>}]} {
    %c0 = arith.constant 0 : index
    %c0_0 = arith.constant 0 : index
    %c0_1 = arith.constant 0 : index
    %0 = vector.load %arg2[%c0, %c0_0, %c0_1] : memref<4x1x128xf32, #tpu.memory_space<vmem>>, vector<1x1x128xf32>
    %1 = vector.shape_cast %0 : vector<1x1x128xf32> to vector<1x128xf32>
    %c1 = arith.constant 1 : index
    %c0_2 = arith.constant 0 : index
    %c0_3 = arith.constant 0 : index
    %2 = vector.load %arg2[%c1, %c0_2, %c0_3] : memref<4x1x128xf32, #tpu.memory_space<vmem>>, vector<1x1x128xf32>
    %3 = vector.shape_cast %2 : vector<1x1x128xf32> to vector<1x128xf32>
    %c2 = arith.constant 2 : index
    %c0_4 = arith.constant 0 : index
    %c0_5 = arith.constant 0 : index
    %4 = vector.load %arg2[%c2, %c0_4, %c0_5] : memref<4x1x128xf32, #tpu.memory_space<vmem>>, vector<1x1x128xf32>
    %5 = vector.shape_cast %4 : vector<1x1x128xf32> to vector<1x128xf32>
    %c3 = arith.constant 3 : index
    %c0_6 = arith.constant 0 : index
    %c0_7 = arith.constant 0 : index
    %6 = vector.load %arg2[%c3, %c0_6, %c0_7] : memref<4x1x128xf32, #tpu.memory_space<vmem>>, vector<1x1x128xf32>
    %7 = vector.shape_cast %6 : vector<1x1x128xf32> to vector<1x128xf32>
    %c0_8 = arith.constant 0 : index
    %c0_9 = arith.constant 0 : index
    %8 = vector.load %arg3[%c0_8, %c0_9] : memref<1x128xi32, #tpu.memory_space<vmem>>, vector<1x128xi32>
    %c0_10 = arith.constant 0 : index
    %9 = memref.load %arg1[%c0_10] : memref<14xf32, #tpu.memory_space<smem>>
    %10 = vector.broadcast %9 : f32 to vector<1x128xf32>
    %11 = arith.mulf %10, %1 : vector<1x128xf32>
    %c1_11 = arith.constant 1 : index
    %12 = memref.load %arg1[%c1_11] : memref<14xf32, #tpu.memory_space<smem>>
    %13 = vector.broadcast %12 : f32 to vector<1x128xf32>
    %14 = arith.mulf %13, %3 : vector<1x128xf32>
    %15 = arith.addf %11, %14 : vector<1x128xf32>
    %c2_12 = arith.constant 2 : index
    %16 = memref.load %arg1[%c2_12] : memref<14xf32, #tpu.memory_space<smem>>
    %17 = vector.broadcast %16 : f32 to vector<1x128xf32>
    %18 = arith.mulf %17, %5 : vector<1x128xf32>
    %19 = arith.addf %15, %18 : vector<1x128xf32>
    %c3_13 = arith.constant 3 : index
    %20 = memref.load %arg1[%c3_13] : memref<14xf32, #tpu.memory_space<smem>>
    %21 = vector.broadcast %20 : f32 to vector<1x128xf32>
    %22 = arith.mulf %21, %7 : vector<1x128xf32>
    %23 = arith.addf %19, %22 : vector<1x128xf32>
    %c3_i32 = arith.constant 3 : i32
    %24 = vector.broadcast %c3_i32 : i32 to vector<1x128xi32>
    %25 = arith.andi %8, %24 : vector<1x128xi32>
    %c2_i32 = arith.constant 2 : i32
    %26 = vector.broadcast %c2_i32 : i32 to vector<1x128xi32>
    %27 = arith.shrsi %8, %26 : vector<1x128xi32>
    %c3_i32_14 = arith.constant 3 : i32
    %28 = vector.broadcast %c3_i32_14 : i32 to vector<1x128xi32>
    %29 = arith.andi %27, %28 : vector<1x128xi32>
    %c4_i32 = arith.constant 4 : i32
    %30 = vector.broadcast %c4_i32 : i32 to vector<1x128xi32>
    %31 = arith.shrsi %8, %30 : vector<1x128xi32>
    %c3_i32_15 = arith.constant 3 : i32
    %32 = vector.broadcast %c3_i32_15 : i32 to vector<1x128xi32>
    %33 = arith.andi %31, %32 : vector<1x128xi32>
    %c0_i32 = arith.constant 0 : i32
    %34 = vector.broadcast %c0_i32 : i32 to vector<1x128xi32>
    %35 = arith.cmpi eq, %25, %34 : vector<1x128xi32>
    %c4 = arith.constant 4 : index
    %36 = memref.load %arg1[%c4] : memref<14xf32, #tpu.memory_space<smem>>
    %c5 = arith.constant 5 : index
    %37 = memref.load %arg1[%c5] : memref<14xf32, #tpu.memory_space<smem>>
    %38 = vector.broadcast %36 : f32 to vector<1x128xf32>
    %39 = vector.broadcast %37 : f32 to vector<1x128xf32>
    %40 = arith.select %35, %38, %39 : vector<1x128xi1>, vector<1x128xf32>
    %41 = arith.addf %23, %40 : vector<1x128xf32>
    %c0_i32_16 = arith.constant 0 : i32
    %42 = vector.broadcast %c0_i32_16 : i32 to vector<1x128xi32>
    %43 = arith.cmpi eq, %29, %42 : vector<1x128xi32>
    %c6 = arith.constant 6 : index
    %44 = memref.load %arg1[%c6] : memref<14xf32, #tpu.memory_space<smem>>
    %cst = arith.constant 0.000000e+00 : f32
    %45 = vector.broadcast %44 : f32 to vector<1x128xf32>
    %46 = vector.broadcast %cst : f32 to vector<1x128xf32>
    %47 = arith.select %43, %45, %46 : vector<1x128xi1>, vector<1x128xf32>
    %c1_i32 = arith.constant 1 : i32
    %48 = vector.broadcast %c1_i32 : i32 to vector<1x128xi32>
    %49 = arith.cmpi eq, %29, %48 : vector<1x128xi32>
    %c7 = arith.constant 7 : index
    %50 = memref.load %arg1[%c7] : memref<14xf32, #tpu.memory_space<smem>>
    %cst_17 = arith.constant 0.000000e+00 : f32
    %51 = vector.broadcast %50 : f32 to vector<1x128xf32>
    %52 = vector.broadcast %cst_17 : f32 to vector<1x128xf32>
    %53 = arith.select %49, %51, %52 : vector<1x128xi1>, vector<1x128xf32>
    %54 = arith.addf %47, %53 : vector<1x128xf32>
    %c2_i32_18 = arith.constant 2 : i32
    %55 = vector.broadcast %c2_i32_18 : i32 to vector<1x128xi32>
    %56 = arith.cmpi eq, %29, %55 : vector<1x128xi32>
    %c8 = arith.constant 8 : index
    %57 = memref.load %arg1[%c8] : memref<14xf32, #tpu.memory_space<smem>>
    %cst_19 = arith.constant 0.000000e+00 : f32
    %58 = vector.broadcast %57 : f32 to vector<1x128xf32>
    %59 = vector.broadcast %cst_19 : f32 to vector<1x128xf32>
    %60 = arith.select %56, %58, %59 : vector<1x128xi1>, vector<1x128xf32>
    %61 = arith.addf %54, %60 : vector<1x128xf32>
    %c3_i32_20 = arith.constant 3 : i32
    %62 = vector.broadcast %c3_i32_20 : i32 to vector<1x128xi32>
    %63 = arith.cmpi eq, %29, %62 : vector<1x128xi32>
    %c9 = arith.constant 9 : index
    %64 = memref.load %arg1[%c9] : memref<14xf32, #tpu.memory_space<smem>>
    %cst_21 = arith.constant 0.000000e+00 : f32
    %65 = vector.broadcast %64 : f32 to vector<1x128xf32>
    %66 = vector.broadcast %cst_21 : f32 to vector<1x128xf32>
    %67 = arith.select %63, %65, %66 : vector<1x128xi1>, vector<1x128xf32>
    %68 = arith.addf %61, %67 : vector<1x128xf32>
    %69 = arith.addf %41, %68 : vector<1x128xf32>
    %c0_i32_22 = arith.constant 0 : i32
    %70 = vector.broadcast %c0_i32_22 : i32 to vector<1x128xi32>
    %71 = arith.cmpi eq, %33, %70 : vector<1x128xi32>
    %c10 = arith.constant 10 : index
    %72 = memref.load %arg1[%c10] : memref<14xf32, #tpu.memory_space<smem>>
    %cst_23 = arith.constant 0.000000e+00 : f32
    %73 = vector.broadcast %72 : f32 to vector<1x128xf32>
    %74 = vector.broadcast %cst_23 : f32 to vector<1x128xf32>
    %75 = arith.select %71, %73, %74 : vector<1x128xi1>, vector<1x128xf32>
    %c1_i32_24 = arith.constant 1 : i32
    %76 = vector.broadcast %c1_i32_24 : i32 to vector<1x128xi32>
    %77 = arith.cmpi eq, %33, %76 : vector<1x128xi32>
    %c11 = arith.constant 11 : index
    %78 = memref.load %arg1[%c11] : memref<14xf32, #tpu.memory_space<smem>>
    %cst_25 = arith.constant 0.000000e+00 : f32
    %79 = vector.broadcast %78 : f32 to vector<1x128xf32>
    %80 = vector.broadcast %cst_25 : f32 to vector<1x128xf32>
    %81 = arith.select %77, %79, %80 : vector<1x128xi1>, vector<1x128xf32>
    %82 = arith.addf %75, %81 : vector<1x128xf32>
    %c2_i32_26 = arith.constant 2 : i32
    %83 = vector.broadcast %c2_i32_26 : i32 to vector<1x128xi32>
    %84 = arith.cmpi eq, %33, %83 : vector<1x128xi32>
    %c12 = arith.constant 12 : index
    %85 = memref.load %arg1[%c12] : memref<14xf32, #tpu.memory_space<smem>>
    %cst_27 = arith.constant 0.000000e+00 : f32
    %86 = vector.broadcast %85 : f32 to vector<1x128xf32>
    %87 = vector.broadcast %cst_27 : f32 to vector<1x128xf32>
    %88 = arith.select %84, %86, %87 : vector<1x128xi1>, vector<1x128xf32>
    %89 = arith.addf %82, %88 : vector<1x128xf32>
    %c3_i32_28 = arith.constant 3 : i32
    %90 = vector.broadcast %c3_i32_28 : i32 to vector<1x128xi32>
    %91 = arith.cmpi eq, %33, %90 : vector<1x128xi32>
    %c13 = arith.constant 13 : index
    %92 = memref.load %arg1[%c13] : memref<14xf32, #tpu.memory_space<smem>>
    %cst_29 = arith.constant 0.000000e+00 : f32
    %93 = vector.broadcast %92 : f32 to vector<1x128xf32>
    %94 = vector.broadcast %cst_29 : f32 to vector<1x128xf32>
    %95 = arith.select %91, %93, %94 : vector<1x128xi1>, vector<1x128xf32>
    %96 = arith.addf %89, %95 : vector<1x128xf32>
    %97 = arith.addf %69, %96 : vector<1x128xf32>
    %c0_30 = arith.constant 0 : index
    %c0_31 = arith.constant 0 : index
    %98 = vector.load %arg4[%c0_30, %c0_31] : memref<1x128xf32, #tpu.memory_space<vmem>>, vector<1x128xf32>
    tpu.vector_store %arg4[%c0_30, %c0_31], %97 {strides = array<i32>} : memref<1x128xf32, #tpu.memory_space<vmem>>, vector<1x128xf32>,
    return
  }
  func.func @transform_0(%arg0: i32) -> i32 {
    %c0_i32 = arith.constant 0 : i32
    %c0_i32_0 = arith.constant 0 : i32
    return %c0_i32 : i32
  }
  func.func @transform_1(%arg0: i32) -> (i32, i32, i32) {
    %c0_i32 = arith.constant 0 : i32
    %c0_i32_0 = arith.constant 0 : i32
    %c0_i32_1 = arith.constant 0 : i32
    return %c0_i32, %arg0, %c0_i32_0 : i32, i32, i32
  }
  func.func @transform_2(%arg0: i32) -> (i32, i32) {
    %c0_i32 = arith.constant 0 : i32
    %c0_i32_0 = arith.constant 0 : i32
    return %arg0, %c0_i32 : i32, i32
  }
  func.func @transform_3(%arg0: i32) -> (i32, i32) {
    %c0_i32 = arith.constant 0 : i32
    %c0_i32_0 = arith.constant 0 : i32
    return %arg0, %c0_i32 : i32, i32
  }
}

</mosaic_0001>

<llo_original>
// kernel: model_forward.1
$region0: #{model_forward.1}
  #allocation0 [shape = 'u32[]', space=smem, size = 0x4, offset = 0x4, fixed_abs, tag = 'smem constant byte address 0x4 - core index']
  #allocation1 [shape = 'u32[144,128]{1,0:T(1,128)}', space=vmem, size = 0x12000, scoped, tag = 'internal scratch']
  %s0 = inlined_call_operand.vmem [shape: f32[14], index: 0, kind: input, shape index: {}]
  %s1 = inlined_call_operand.vmem [shape: f32[4,1,128], index: 1, kind: input, shape index: {}]
  %s2 = inlined_call_operand.vmem [shape: s32[1,128], index: 2, kind: input, shape index: {}]
  %s3 = inlined_call_operand.vmem [shape: f32[1,128], index: 3, kind: output, shape index: {}]
  %s4 = sld [smem:[#allocation0]]
  $region26: #{model_forward.1} parent=0
    _
  %s6 = ssub.s32 1, %s4
  %s7 = scalar_select 0, %s6, %s4
  $region1: #{model_forward.1} parent=0
    #allocation2 [shape = 'u8[512]{0}', space=smem, size = 0x200, scoped, tag = 'input window, operand 0, single buffered']
    #allocation3 [shape = 's32[1]{0}', space=sflag, size = 0x4, scoped, tag = 'scoped memory for model_forward.1']
    %8 = vsyncpa [#allocation3], 0
    // Predicated region
    $region2: #{model_forward.1} parent=1 // pred_check
      _
    $region3: #{model_forward.1} parent=1 // pred_check_branch
      %10 = sbr.rel (0) target = $region5
    $region4: #{model_forward.1} parent=1 // pred_region
      %s12 = ssub.s32 16, 16
      %13 = vsyncadd [#allocation3], %s12
      %s15 = sshll.u32 %s0, 4
      %s16 = int_to_ptr.vmem [resolvable:$true] %s15
      %18 = dma.vmem_to_smem %s16, 16, [#allocation2], [#allocation3]
    $region5: #{model_forward.1} parent=1 // pred_fallthru
      _
    // Predicated region
    $region6: #{model_forward.1} parent=1 // pred_check
      _
    $region7: #{model_forward.1} parent=1 // pred_check_branch
      %20 = sbr.rel (0) target = $region9
    $region8: #{model_forward.1} parent=1 // pred_region
      _
    $region9: #{model_forward.1} parent=1 // pred_fallthru
      _
    // Predicated region
    $region10: #{model_forward.1} parent=1 // pred_check
      _
    $region11: #{model_forward.1} parent=1 // pred_check_branch
      %22 = sbr.rel (0) target = $region13
    $region12: #{model_forward.1} parent=1 // pred_region
      _
    $region13: #{model_forward.1} parent=1 // pred_fallthru
      _
    // Predicated region
    $region14: #{model_forward.1} parent=1 // pred_check
      _
    $region15: #{model_forward.1} parent=1 // pred_check_branch
      %24 = sbr.rel (0) target = $region17
    $region16: #{model_forward.1} parent=1 // pred_region
      %25 = dma.done [#allocation3], 16
    $region17: #{model_forward.1} parent=1 // pred_fallthru
      _
    %26 = sfence
    %v27 = vld [vmem:[%s1] sm:$0x1]
    %s28 = scalar_lea.vmem %s1, 1
    %v29 = vld [vmem:[%s28] sm:$0x1]
    %s30 = scalar_lea.vmem %s1, 2
    %v31 = vld [vmem:[%s30] sm:$0x1]
    %s32 = scalar_lea.vmem %s1, 3
    %v33 = vld [vmem:[%s32] sm:$0x1]
    %v34 = vld [vmem:[%s2] sm:$0x1]
    %s35 = sld [smem:[#allocation2]]
    %v36 = vstv %s35
    %v37 = vmul.f32 %v36, %v27
    %s38 = sld [smem:[#allocation2 + $0x1]]
    %v39 = vstv %s38
    %v40 = vmul.f32 %v39, %v29
    %v41 = vadd.f32 %v37, %v40
    %s42 = sld [smem:[#allocation2 + $0x2]]
    %v43 = vstv %s42
    %v44 = vmul.f32 %v43, %v31
    %v45 = vadd.f32 %v41, %v44
    %s46 = sld [smem:[#allocation2 + $0x3]]
    %v47 = vstv %s46
    %v48 = vmul.f32 %v47, %v33
    %v49 = vadd.f32 %v45, %v48
    %v50 = vand.u32 %v34, 3
    %v51 = vshra.s32 %v34, 2
    %v52 = vand.u32 %v51, 3
    %v53 = vshra.s32 %v34, 4
    %v54 = vand.u32 %v53, 3
    %vm55 = vcmp.eq.s32.totalorder %v50, 0
    %s56 = sld [smem:[#allocation2 + $0x4]]
    %s57 = sld [smem:[#allocation2 + $0x5]]
    %v58 = vstv %s56
    %v59 = vstv %s57
    %v60 = vsel %vm55, %v58, %v59
    %v61 = vadd.f32 %v49, %v60
    %vm62 = vcmp.eq.s32.totalorder %v52, 0
    %s63 = sld [smem:[#allocation2 + $0x6]]
    %v64 = vstv %s63
    %v65 = vsel %vm62, %v64, 0.0
    %vm66 = vcmp.eq.s32.totalorder %v52, 1
    %s67 = sld [smem:[#allocation2 + $0x7]]
    %v68 = vstv %s67
    %v69 = vsel %vm66, %v68, 0.0
    %v70 = vadd.f32 %v65, %v69
    %vm71 = vcmp.eq.s32.totalorder %v52, 2
    %s72 = sld [smem:[#allocation2 + $0x8]]
    %v73 = vstv %s72
    %v74 = vsel %vm71, %v73, 0.0
    %v75 = vadd.f32 %v70, %v74
    %vm76 = vcmp.eq.s32.totalorder %v52, 3
    %s77 = sld [smem:[#allocation2 + $0x9]]
    %v78 = vstv %s77
    %v79 = vsel %vm76, %v78, 0.0
    %v80 = vadd.f32 %v75, %v79
    %v81 = vadd.f32 %v61, %v80
    %vm82 = vcmp.eq.s32.totalorder %v54, 0
    %s83 = sld [smem:[#allocation2 + $0xa]]
    %v84 = vstv %s83
    %v85 = vsel %vm82, %v84, 0.0
    %vm86 = vcmp.eq.s32.totalorder %v54, 1
    %s87 = sld [smem:[#allocation2 + $0xb]]
    %v88 = vstv %s87
    %v89 = vsel %vm86, %v88, 0.0
    %v90 = vadd.f32 %v85, %v89
    %vm91 = vcmp.eq.s32.totalorder %v54, 2
    %s92 = sld [smem:[#allocation2 + $0xc]]
    %v93 = vstv %s92
    %v94 = vsel %vm91, %v93, 0.0
    %v95 = vadd.f32 %v90, %v94
    %vm96 = vcmp.eq.s32.totalorder %v54, 3
    %s97 = sld [smem:[#allocation2 + $0xd]]
    %v98 = vstv %s97
    %v99 = vsel %vm96, %v98, 0.0
    %v100 = vadd.f32 %v95, %v99
    %v101 = vadd.f32 %v81, %v100
    %102 = vst [vmem:[%s3] sm:$0x1] %v101
    // Predicated region
    $region18: #{model_forward.1} parent=1 // pred_check
      _
    $region19: #{model_forward.1} parent=1 // pred_check_branch
      %104 = sbr.rel (0) target = $region21
    $region20: #{model_forward.1} parent=1 // pred_region
      _
    $region21: #{model_forward.1} parent=1 // pred_fallthru
      _
    // Predicated region
    $region22: #{model_forward.1} parent=1 // pred_check
      _
    $region23: #{model_forward.1} parent=1 // pred_check_branch
      %106 = sbr.rel (0) target = $region25
    $region24: #{model_forward.1} parent=1 // pred_region
      _
    $region25: #{model_forward.1} parent=1 // pred_fallthru
      _
    %107 = vsyncpa [#allocation3], 1

</llo_original>
